<compile_context>
chip_gen: v7x
topology: tpu7x:2x2x1
jax: 0.10.0
libtpu: 0.0.40
codegen_flags: <defaults>
</compile_context>

<pallas_src>
import math
from functools import partial

import jax
import jax.numpy as jnp
from jax import lax
from jax.experimental import pallas as pl
from jax.experimental.pallas import tpu as pltpu


_VMEM_LIMIT = 32 * 1024 * 1024  # conservative scoped-VMEM cap, valid on v5e/v6e/v7x


def _pick_tile(dim, target, align):
    """Largest `align`-aligned divisor of `dim` that is <= target, else the full dim."""
    if dim <= target:
        return dim
    t = (target // align) * align
    while t >= align:
        if dim % t == 0:
            return t
        t -= align
    return dim


# --------------------------------------------------------------------------
# Kernel 1: tiled, pipelined Linear  (out = x @ W + b)
#   grid = (M/tm, N/tn, K/tk); f32 VMEM accumulator carried across the K axis.
#   Operands may be bf16 (MXU-native); accumulation is always f32.
# --------------------------------------------------------------------------
def _linear_kernel(x_ref, w_ref, b_ref, o_ref, acc_ref):
    @pl.when(pl.program_id(2) == 0)
    def _init():
        acc_ref[...] = jnp.zeros_like(acc_ref)

    acc_ref[...] += jnp.dot(x_ref[...], w_ref[...],
                            preferred_element_type=jnp.float32)

    @pl.when(pl.program_id(2) == pl.num_programs(2) - 1)
    def _finalize():
        o_ref[...] = (acc_ref[...] + b_ref[...]).astype(o_ref.dtype)


def linear(x, w, b2d, *, out_dtype=jnp.float32, tm=256, tn=512, tk=512):
    # x: (M, K), w: (K, N), b2d: (1, N)  (bias kept in f32)
    M, K = x.shape
    N = w.shape[1]
    tm = _pick_tile(M, tm, 8)
    tn = _pick_tile(N, tn, 128)
    tk = _pick_tile(K, tk, 128)
    grid = (M // tm, N // tn, K // tk)
    return pl.pallas_call(
        _linear_kernel,
        out_shape=jax.ShapeDtypeStruct((M, N), out_dtype),
        grid=grid,
        in_specs=[
            pl.BlockSpec((tm, tk), lambda i, j, k: (i, k)),
            pl.BlockSpec((tk, tn), lambda i, j, k: (k, j)),
            pl.BlockSpec((1, tn), lambda i, j, k: (0, j)),
        ],
        out_specs=pl.BlockSpec((tm, tn), lambda i, j, k: (i, j)),
        scratch_shapes=[pltpu.VMEM((tm, tn), jnp.float32)],
        compiler_params=pltpu.CompilerParams(
            dimension_semantics=("parallel", "parallel", "arbitrary"),
            vmem_limit_bytes=_VMEM_LIMIT,
        ),
    )(x, w, b2d)


# --------------------------------------------------------------------------
# Kernel 2: scaled-dot-product attention.
#   Grid is (batch, query-tiles); all heads are processed inside the kernel
#   (statically unrolled) so Q/K/V can be consumed directly in the
#   (B, S, H, Dh) projection layout — no HBM transposes.
#   energy = (q*scale) K^T; mask==0 -> -10000; softmax in f32; ctx = attn @ V.
# --------------------------------------------------------------------------
def _attention_kernel(q_ref, k_ref, v_ref, mask_ref, ctx_ref, attn_ref, *,
                      scale, n_heads, compute_dtype):
    # q_ref:    (tq,  H, Dh)
    # k_ref:    (Skv, H, Dh)
    # v_ref:    (Skv, H, Dh)
    # mask_ref: (1, Skv)
    # ctx_ref:  (tq,  H, Dh)
    # attn_ref: (H, tq, Skv)
    mask_is_zero = mask_ref[...] == 0                        # (1, Skv), hoisted
    exact = jnp.dtype(compute_dtype) == jnp.dtype(jnp.float32)

    for h in range(n_heads):                                 # static unroll
        # Fold 1/sqrt(d_k) into q: S*Dh VPU work instead of S*S.
        q_h = (q_ref[:, h, :].astype(jnp.float32) * scale).astype(compute_dtype)
        k_h = k_ref[:, h, :].astype(compute_dtype)
        v_h = v_ref[:, h, :].astype(compute_dtype)

        # Contract the last dims of both operands: no materialized k.T.
        energy = lax.dot_general(
            q_h, k_h, (((1,), (1,)), ((), ())),
            preferred_element_type=jnp.float32)              # (tq, Skv) f32

        energy = jnp.where(mask_is_zero, jnp.float32(-10000.0), energy)

        # Softmax in f32.
        row_max = jnp.max(energy, axis=-1, keepdims=True)
        p = jnp.exp(energy - row_max)
        denom = jnp.sum(p, axis=-1, keepdims=True)
        # EUP reciprocal (approx) in the fast path; exact in the f32 path.
        attn = p * pl.reciprocal(denom, approx=not exact)

        attn_ref[h, :, :] = attn
        ctx = jnp.dot(attn.astype(compute_dtype), v_h,
                      preferred_element_type=jnp.float32)    # (tq, Dh)
        ctx_ref[:, h, :] = ctx.astype(ctx_ref.dtype)


def attention(q, k, v, mask, scale, *, compute_dtype, tq=256):
    # q: (B, Sq, H, Dh);  k, v: (B, Skv, H, Dh);  mask: (B, 1, 1, Skv)
    B, Sq, H, Dh = q.shape
    Skv = k.shape[1]
    tq = _pick_tile(Sq, tq, 8)
    kern = partial(_attention_kernel, scale=scale, n_heads=H,
                   compute_dtype=compute_dtype)
    ctx, attn = pl.pallas_call(
        kern,
        out_shape=(
            jax.ShapeDtypeStruct((B, Sq, H, Dh), q.dtype),
            jax.ShapeDtypeStruct((B, H, Sq, Skv), jnp.float32),
        ),
        grid=(B, Sq // tq),
        in_specs=[
            pl.BlockSpec((None, tq, H, Dh), lambda b, qi: (b, qi, 0, 0)),
            # K/V block index is constant across the query-tile axis -> the
            # pipeline keeps them resident (no re-DMA per query tile).
            pl.BlockSpec((None, Skv, H, Dh), lambda b, qi: (b, 0, 0, 0)),
            pl.BlockSpec((None, Skv, H, Dh), lambda b, qi: (b, 0, 0, 0)),
            pl.BlockSpec((None, None, 1, Skv), lambda b, qi: (b, 0, 0, 0)),
        ],
        out_specs=(
            pl.BlockSpec((None, tq, H, Dh), lambda b, qi: (b, qi, 0, 0)),
            pl.BlockSpec((None, H, tq, Skv), lambda b, qi: (b, 0, qi, 0)),
        ),
        compiler_params=pltpu.CompilerParams(
            dimension_semantics=("parallel", "parallel"),
            vmem_limit_bytes=_VMEM_LIMIT,
        ),
    )(q, k, v, mask)
    return ctx, attn


# --------------------------------------------------------------------------
# Full forward pass (mirrors MultiHeadAttentionLayer.forward)
# --------------------------------------------------------------------------
def multi_head_attention(query, key, value, w, b, n_heads, mask=None, *,
                         compute_dtype=jnp.bfloat16):
    B, Sq, hid = query.shape
    Skv = key.shape[1]
    head_dim = hid // n_heads
    scale = 1.0 / math.sqrt(head_dim)

    w_c = w.astype(compute_dtype)
    b2d = b.reshape(1, hid).astype(jnp.float32)

    # Fused Q/K/V projection: one tiled matmul over the stacked inputs so the
    # shared weight is streamed from HBM once and the MXU sees a 3x larger M.
    xs = jnp.concatenate(
        [query.reshape(B * Sq, hid),
         key.reshape(B * Skv, hid),
         value.reshape(B * Skv, hid)], axis=0).astype(compute_dtype)
    qkv = linear(xs, w_c, b2d, out_dtype=compute_dtype)

    nq, nk = B * Sq, B * Skv
    # Head split is a pure reshape (no HBM transpose); the attention kernel
    # consumes the (B, S, H, Dh) layout directly via its BlockSpecs.
    Q = qkv[:nq].reshape(B, Sq, n_heads, head_dim)
    K = qkv[nq:nq + nk].reshape(B, Skv, n_heads, head_dim)
    V = qkv[nq + nk:].reshape(B, Skv, n_heads, head_dim)

    if mask is None:
        mask_arr = jnp.ones((B, 1, 1, Skv), dtype=jnp.float32)
    else:
        mask_arr = mask.reshape(B, 1, 1, Skv).astype(jnp.float32)

    ctx, attn = attention(Q, K, V, mask_arr, scale, compute_dtype=compute_dtype)

    # ctx is already (B, Sq, H, Dh); merging heads is a free reshape.
    out = linear(ctx.reshape(B * Sq, hid), w_c, b2d, out_dtype=jnp.float32)
    return out.reshape(B, Sq, hid), attn


# --------------------------------------------------------------------------
# Pure-JAX reference (for correctness check)
# --------------------------------------------------------------------------
def reference(query, key, value, w, b, n_heads, mask=None):
    B, S, hid = query.shape
    head_dim = hid // n_heads

    def transform(x):
        out = x @ w + b
        return out.reshape(B, -1, n_heads, head_dim).transpose(0, 2, 1, 3)

    Q, K, V = transform(query), transform(key), transform(value)
    energy = jnp.einsum("bhqd,bhkd->bhqk", Q, K) / math.sqrt(head_dim)
    if mask is not None:
        m = mask.reshape(B, 1, 1, S)
        energy = jnp.where(m == 0, -10000.0, energy)
    attn = jax.nn.softmax(energy, axis=-1)
    out = jnp.einsum("bhqk,bhkd->bhqd", attn, V)
    out = out.transpose(0, 2, 1, 3).reshape(B, S, hid)
    out = out @ w + b
    return out, attn


if __name__ == "__main__":
    B, S, hid, n_heads = 2, 8, 32, 4

    key0 = jax.random.PRNGKey(0)
    kq, kk, kv, kw, kb = jax.random.split(key0, 5)

    query = jax.random.normal(kq, (B, S, hid), dtype=jnp.float32)
    key_t = jax.random.normal(kk, (B, S, hid), dtype=jnp.float32)
    value = jax.random.normal(kv, (B, S, hid), dtype=jnp.float32)

    # Deterministic synthetic nn.Linear(hid, hid) params (uniform +/- 1/sqrt(hid)),
    # stored in (in, out) layout.
    bound = 1.0 / math.sqrt(hid)
    w = jax.random.uniform(kw, (hid, hid), minval=-bound, maxval=bound,
                           dtype=jnp.float32)
    b = jax.random.uniform(kb, (hid,), minval=-bound, maxval=bound,
                           dtype=jnp.float32)

    # Padding-style mask: last two key positions of every batch are masked out.
    mask = (jnp.arange(S)[None, :] < (S - 2)).astype(jnp.int32)
    mask = jnp.broadcast_to(mask, (B, S))

    out_ref, attn_ref = reference(query, key_t, value, w, b, n_heads, mask=mask)

    # Exact-precision path (f32 operands everywhere) -- tight correctness check.
    out32, attn32 = multi_head_attention(query, key_t, value, w, b, n_heads,
                                         mask=mask, compute_dtype=jnp.float32)
    out32 = jax.block_until_ready(out32)
    attn32 = jax.block_until_ready(attn32)
    assert out32.shape == (B, S, hid)
    assert attn32.shape == (B, n_heads, S, S)
    assert jnp.allclose(out32, out_ref, atol=1e-4, rtol=1e-4)
    assert jnp.allclose(attn32, attn_ref, atol=1e-4, rtol=1e-4)

    # Fast path (bf16 MXU operands, f32 accumulation & softmax) -- looser check.
    out16, attn16 = multi_head_attention(query, key_t, value, w, b, n_heads,
                                         mask=mask, compute_dtype=jnp.bfloat16)
    out16 = jax.block_until_ready(out16)
    attn16 = jax.block_until_ready(attn16)
    assert out16.shape == (B, S, hid)
    assert attn16.shape == (B, n_heads, S, S)
    assert jnp.allclose(out16, out_ref, atol=5e-2, rtol=5e-2)
    assert jnp.allclose(attn16, attn_ref, atol=5e-2, rtol=5e-2)

    print("KERNEL_OK")
</pallas_src>

<mosaic_0001>
module attributes {stable_mosaic.version = 11 : i64} {
  func.func @_linear_kernel(%arg0: i32, %arg1: i32, %arg2: i32, %arg3: memref<48x32xf32, #tpu.memory_space<vmem>>, %arg4: memref<32x32xf32, #tpu.memory_space<vmem>>, %arg5: memref<1x32xf32, #tpu.memory_space<vmem>>, %arg6: memref<48x32xf32, #tpu.memory_space<vmem>>, %arg7: memref<48x32xf32, #tpu.memory_space<vmem>>) attributes {dimension_semantics = [#tpu.dimension_semantics<parallel>, #tpu.dimension_semantics<parallel>, #tpu.dimension_semantics<arbitrary>], iteration_bounds = array<i64: 1, 1, 1>, scalar_prefetch = 0 : i64, scratch_operands = 1 : i64, tpu.core_type = #tpu.core_type<tc>, window_params = [{transform_indices = @transform_0, window_bounds = array<i64: 48, 32>}, {transform_indices = @transform_1, window_bounds = array<i64: 32, 32>}, {transform_indices = @transform_2, window_bounds = array<i64: 1, 32>}, {transform_indices = @transform_3, window_bounds = array<i64: 48, 32>}]} {
    %c0_i32 = arith.constant 0 : i32
    %0 = arith.cmpi eq, %arg2, %c0_i32 : i32
    %1 = arith.extui %0 : i1 to i32
    %c0_i32_0 = arith.constant 0 : i32
    %2 = arith.cmpi ne, %1, %c0_i32_0 : i32
    scf.if %2 {
      %cst_10 = arith.constant 0.000000e+00 : f32
      %12 = vector.broadcast %cst_10 : f32 to vector<48x32xf32>
      %c0_11 = arith.constant 0 : index
      %c0_12 = arith.constant 0 : index
      %13 = vector.load %arg7[%c0_11, %c0_12] : memref<48x32xf32, #tpu.memory_space<vmem>>, vector<48x32xf32>
      tpu.vector_store %arg7[%c0_11, %c0_12], %12 {strides = array<i32>} : memref<48x32xf32, #tpu.memory_space<vmem>>, vector<48x32xf32>,
    } else {
    }
    %c0 = arith.constant 0 : index
    %c0_1 = arith.constant 0 : index
    %3 = vector.load %arg7[%c0, %c0_1] : memref<48x32xf32, #tpu.memory_space<vmem>>, vector<48x32xf32>
    %c0_2 = arith.constant 0 : index
    %c0_3 = arith.constant 0 : index
    %4 = vector.load %arg3[%c0_2, %c0_3] : memref<48x32xf32, #tpu.memory_space<vmem>>, vector<48x32xf32>
    %c0_4 = arith.constant 0 : index
    %c0_5 = arith.constant 0 : index
    %5 = vector.load %arg4[%c0_4, %c0_5] : memref<32x32xf32, #tpu.memory_space<vmem>>, vector<32x32xf32>
    %cst = arith.constant dense<0.000000e+00> : vector<48x32xf32>
    %6 = tpu.matmul %4, %5, %cst {dimension_numbers = #tpu.dot_dimension_numbers<[1], [0], [0], [1], [0, 0, 1, 1], [], []>} : vector<48x32xf32>, vector<32x32xf32>, vector<48x32xf32> -> vector<48x32xf32>
    %7 = arith.addf %3, %6 : vector<48x32xf32>
    %c0_6 = arith.constant 0 : index
    %c0_7 = arith.constant 0 : index
    %8 = vector.load %arg7[%c0_6, %c0_7] : memref<48x32xf32, #tpu.memory_space<vmem>>, vector<48x32xf32>
    tpu.vector_store %arg7[%c0_6, %c0_7], %7 {strides = array<i32>} : memref<48x32xf32, #tpu.memory_space<vmem>>, vector<48x32xf32>,
    %c0_i32_8 = arith.constant 0 : i32
    %9 = arith.cmpi eq, %arg2, %c0_i32_8 : i32
    %10 = arith.extui %9 : i1 to i32
    %c0_i32_9 = arith.constant 0 : i32
    %11 = arith.cmpi ne, %10, %c0_i32_9 : i32
    scf.if %11 {
      %c0_10 = arith.constant 0 : index
      %c0_11 = arith.constant 0 : index
      %12 = vector.load %arg7[%c0_10, %c0_11] : memref<48x32xf32, #tpu.memory_space<vmem>>, vector<48x32xf32>
      %c0_12 = arith.constant 0 : index
      %c0_13 = arith.constant 0 : index
      %13 = vector.load %arg5[%c0_12, %c0_13] : memref<1x32xf32, #tpu.memory_space<vmem>>, vector<1x32xf32>
      %14 = vector.broadcast %13 : vector<1x32xf32> to vector<48x32xf32>
      %15 = arith.addf %12, %14 : vector<48x32xf32>
      %c0_14 = arith.constant 0 : index
      %c0_15 = arith.constant 0 : index
      %16 = vector.load %arg6[%c0_14, %c0_15] : memref<48x32xf32, #tpu.memory_space<vmem>>, vector<48x32xf32>
      tpu.vector_store %arg6[%c0_14, %c0_15], %15 {strides = array<i32>} : memref<48x32xf32, #tpu.memory_space<vmem>>, vector<48x32xf32>,
    } else {
    }
    return
  }
  func.func @transform_0(%arg0: i32, %arg1: i32, %arg2: i32) -> (i32, i32) {
    %c0_i32 = arith.constant 0 : i32
    return %arg0, %arg2 : i32, i32
  }
  func.func @transform_1(%arg0: i32, %arg1: i32, %arg2: i32) -> (i32, i32) {
    %c0_i32 = arith.constant 0 : i32
    return %arg2, %arg1 : i32, i32
  }
  func.func @transform_2(%arg0: i32, %arg1: i32, %arg2: i32) -> (i32, i32) {
    %c0_i32 = arith.constant 0 : i32
    %c0_i32_0 = arith.constant 0 : i32
    return %c0_i32, %arg1 : i32, i32
  }
  func.func @transform_3(%arg0: i32, %arg1: i32, %arg2: i32) -> (i32, i32) {
    %c0_i32 = arith.constant 0 : i32
    return %arg0, %arg1 : i32, i32
  }
}

</mosaic_0001>

<llo_original>
// kernel: tpu_custom_call.1
$region0: #{tpu_custom_call.1}
  #allocation0 [shape = 'u32[]', space=smem, size = 0x4, offset = 0x4, fixed_abs, tag = 'smem constant byte address 0x4 - core index']
  #allocation1 [shape = 'u32[144,128]{1,0:T(1,128)}', space=vmem, size = 0x12000, scoped, tag = 'internal scratch']
  #allocation2 [shape = 'f32[48,32]{1,0:T(8,128)}', space=vmem, size = 0x6000, scoped, tag = 'scratch operand']
  %s0 = inlined_call_operand.vmem [shape: f32[48,32], index: 0, kind: input, shape index: {}]
  %s1 = inlined_call_operand.vmem [shape: f32[32,32], index: 1, kind: input, shape index: {}]
  %s2 = inlined_call_operand.vmem [shape: f32[1,32], index: 2, kind: input, shape index: {}]
  %s3 = inlined_call_operand.vmem [shape: f32[48,32], index: 3, kind: output, shape index: {}]
  %s4 = sld [smem:[#allocation0]]
  $region30: #{tpu_custom_call.1} parent=0
    _
  %s6 = ssub.s32 1, %s4
  %s7 = scalar_select 0, %s6, %s4
  // Predicated region
  $region2: #{tpu_custom_call.1} parent=0 // pred_check
    _
  $region3: #{tpu_custom_call.1} parent=0 // pred_check_branch
    %9 = sbr.rel (0) target = $region5
  $region4: #{tpu_custom_call.1} parent=0 // pred_region
    _
  $region5: #{tpu_custom_call.1} parent=0 // pred_fallthru
    _
  // Predicated region
  $region6: #{tpu_custom_call.1} parent=0 // pred_check
    _
  $region7: #{tpu_custom_call.1} parent=0 // pred_check_branch
    %11 = sbr.rel (0) target = $region9
  $region8: #{tpu_custom_call.1} parent=0 // pred_region
    _
  $region9: #{tpu_custom_call.1} parent=0 // pred_fallthru
    _
  // Predicated region
  $region10: #{tpu_custom_call.1} parent=0 // pred_check
    _
  $region11: #{tpu_custom_call.1} parent=0 // pred_check_branch
    %13 = sbr.rel (0) target = $region13
  $region12: #{tpu_custom_call.1} parent=0 // pred_region
    _
  $region13: #{tpu_custom_call.1} parent=0 // pred_fallthru
    _
  %p14 = scmp.eq.s32.totalorder 0, 0
  // Predicated region
  $region14: #{tpu_custom_call.1} parent=0 // pred_check
    %p15 = pneg %p14
  $region15: #{tpu_custom_call.1} parent=0 // pred_check_branch
    %17 = sbr.rel (%p15) target = $region17
  $region16: #{tpu_custom_call.1} parent=0 // pred_region
    %vm18 = vcmask 261120
    %19 = vst.msk [vmem:[#allocation2] sm:$0xff] %vm18, 0.0
    %20 = vst.msk [vmem:[#allocation2 + $0x8] sm:$0xff] %vm18, 0.0
    %21 = vst.msk [vmem:[#allocation2 + $0x10] sm:$0xff] %vm18, 0.0
    %22 = vst.msk [vmem:[#allocation2 + $0x18] sm:$0xff] %vm18, 0.0
    %23 = vst.msk [vmem:[#allocation2 + $0x20] sm:$0xff] %vm18, 0.0
    %24 = vst.msk [vmem:[#allocation2 + $0x28] sm:$0xff] %vm18, 0.0
  $region17: #{tpu_custom_call.1} parent=0 // pred_fallthru
    _
  %v25 = vld [vmem:[#allocation2] sm:$0xff]
  %v26 = vld [vmem:[#allocation2 + $0x8] sm:$0xff]
  %v27 = vld [vmem:[#allocation2 + $0x10] sm:$0xff]
  %v28 = vld [vmem:[#allocation2 + $0x18] sm:$0xff]
  %v29 = vld [vmem:[#allocation2 + $0x20] sm:$0xff]
  %v30 = vld [vmem:[#allocation2 + $0x28] sm:$0xff]
  %v31 = vld [vmem:[%s0] sm:$0xff]
  %v32 = vld [vmem:[%s0 + $0x8] sm:$0xff]
  %v33 = vld [vmem:[%s0 + $0x10] sm:$0xff]
  %v34 = vld [vmem:[%s0 + $0x18] sm:$0xff]
  %v35 = vld [vmem:[%s0 + $0x20] sm:$0xff]
  %v36 = vld [vmem:[%s0 + $0x28] sm:$0xff]
  %v37 = vld [vmem:[%s1] sm:$0xff]
  %v38 = vld [vmem:[%s1 + $0x8] sm:$0xff]
  %v39 = vld [vmem:[%s1 + $0x10] sm:$0xff]
  %v40 = vld [vmem:[%s1 + $0x18] sm:$0xff]
  %vm41 = vcmask 261120
  %v43 = vsel %vm41, %v31, 0
  %v46 = vsel %vm41, %v32, 0
  %v49 = vsel %vm41, %v33, 0
  %v52 = vsel %vm41, %v34, 0
  %v55 = vsel %vm41, %v35, 0
  %v58 = vsel %vm41, %v36, 0
  %60 = vmatprep.subr.mxu0 0.0
  %61 = vmatpush1.msra.mxu0 %v37
  %62 = vmatprep.subr.mxu0 0.0
  %63 = vmatpush1.msra.mxu0 %v38
  %64 = vmatprep.subr.mxu0 0.0
  %65 = vmatpush1.msra.mxu0 %v39
  %66 = vmatprep.subr.mxu0 0.0
  %67 = vmatpush1.msra.mxu0 %v40
  %68 = vmatprep.subr.mxu0 0.0
  %69 = vmatpush1.msra.mxu0 0.0
  %70 = vmatprep.subr.mxu0 0.0
  %71 = vmatpush1.msra.mxu0 0.0
  %72 = vmatprep.subr.mxu0 0.0
  %73 = vmatpush1.msra.mxu0 0.0
  %74 = vmatprep.subr.mxu0 0.0
  %75 = vmatpush1.msra.mxu0 0.0
  %76 = vmatprep.subr.mxu0 0.0
  %77 = vmatpush1.msra.mxu0 0.0
  %78 = vmatprep.subr.mxu0 0.0
  %79 = vmatpush1.msra.mxu0 0.0
  %80 = vmatprep.subr.mxu0 0.0
  %81 = vmatpush1.msra.mxu0 0.0
  %82 = vmatprep.subr.mxu0 0.0
  %83 = vmatpush1.msra.mxu0 0.0
  %84 = vmatprep.subr.mxu0 0.0
  %85 = vmatpush1.msra.mxu0 0.0
  %86 = vmatprep.subr.mxu0 0.0
  %87 = vmatpush1.msra.mxu0 0.0
  %88 = vmatprep.subr.mxu0 0.0
  %89 = vmatpush1.msra.mxu0 0.0
  %90 = vmatprep.subr.mxu0 0.0
  %91 = vmatpush1.msra.mxu0 0.0
  %92 = vmatprep.subr.mxu0 0.0
  %93 = vmatpush1.msra.mxu0 0.0
  %94 = vmatprep.subr.mxu0 0.0
  %95 = vmatpush1.msra.mxu0 0.0
  %96 = vmatprep.subr.mxu0 0.0
  %97 = vmatpush1.msra.mxu0 0.0
  %98 = vmatprep.subr.mxu0 0.0
  %99 = vmatpush1.msra.mxu0 0.0
  %100 = vmatprep.subr.mxu0 0.0
  %101 = vmatpush1.msra.mxu0 0.0
  %102 = vmatprep.subr.mxu0 0.0
  %103 = vmatpush1.msra.mxu0 0.0
  %104 = vmatprep.subr.mxu0 0.0
  %105 = vmatpush1.msra.mxu0 0.0
  %106 = vmatprep.subr.mxu0 0.0
  %107 = vmatpush1.msra.mxu0 0.0
  %108 = vmatprep.subr.mxu0 0.0
  %109 = vmatpush1.msra.mxu0 0.0
  %110 = vmatprep.subr.mxu0 0.0
  %111 = vmatpush1.msra.mxu0 0.0
  %112 = vmatprep.subr.mxu0 0.0
  %113 = vmatpush1.msra.mxu0 0.0
  %114 = vmatprep.subr.mxu0 0.0
  %115 = vmatpush1.msra.mxu0 0.0
  %116 = vmatprep.subr.mxu0 0.0
  %117 = vmatpush1.msra.mxu0 0.0
  %118 = vmatprep.subr.mxu0 0.0
  %119 = vmatpush1.msra.mxu0 0.0
  %120 = vmatprep.subr.mxu0 0.0
  %121 = vmatpush1.msra.mxu0 0.0
  %122 = vmatprep.subr.mxu0 0.0
  %123 = vmatpush1.msra.mxu0 0.0
  %124 = vmatprep.mubr.f32.mxu0 0.0
  %125 = vmatmul.mubr.f32.gmra.mrb[0].mxu0 %v43
  %v126 = vpop.f32.mrb[0].mxu0
  %v127 = vadd.f32 0.0, %v126
  %v128 = vpop.f32.mrb[0].mxu0
  %129 = vmatprep.mubr.f32.mxu0 0.0
  %130 = vmatmul.mubr.f32.gmra.mrb[0].mxu0 %v46
  %v131 = vpop.f32.mrb[0].mxu0
  %v132 = vadd.f32 0.0, %v131
  %v133 = vpop.f32.mrb[0].mxu0
  %134 = vmatprep.mubr.f32.mxu0 0.0
  %135 = vmatmul.mubr.f32.gmra.mrb[0].mxu0 %v49
  %v136 = vpop.f32.mrb[0].mxu0
  %v137 = vadd.f32 0.0, %v136
  %v138 = vpop.f32.mrb[0].mxu0
  %139 = vmatprep.mubr.f32.mxu0 0.0
  %140 = vmatmul.mubr.f32.gmra.mrb[0].mxu0 %v52
  %v141 = vpop.f32.mrb[0].mxu0
  %v142 = vadd.f32 0.0, %v141
  %v143 = vpop.f32.mrb[0].mxu0
  %144 = vmatprep.mubr.f32.mxu0 0.0
  %145 = vmatmul.mubr.f32.gmra.mrb[0].mxu0 %v55
  %v146 = vpop.f32.mrb[0].mxu0
  %v147 = vadd.f32 0.0, %v146
  %v148 = vpop.f32.mrb[0].mxu0
  %149 = vmatprep.mubr.f32.mxu0 0.0
  %150 = vmatmul.mubr.f32.gmra.mrb[0].mxu0 %v58
  %v151 = vpop.f32.mrb[0].mxu0
  %v152 = vadd.f32 0.0, %v151
  %v153 = vpop.f32.mrb[0].mxu0
  %154 = vdwg.mxu0
  %v155 = vadd.f32 %v25, %v127
  %v156 = vadd.f32 %v26, %v132
  %v157 = vadd.f32 %v27, %v137
  %v158 = vadd.f32 %v28, %v142
  %v159 = vadd.f32 %v29, %v147
  %v160 = vadd.f32 %v30, %v152
  %161 = vst.msk [vmem:[#allocation2] sm:$0xff] %vm41, %v155
  %162 = vst.msk [vmem:[#allocation2 + $0x8] sm:$0xff] %vm41, %v156
  %163 = vst.msk [vmem:[#allocation2 + $0x10] sm:$0xff] %vm41, %v157
  %164 = vst.msk [vmem:[#allocation2 + $0x18] sm:$0xff] %vm41, %v158
  %165 = vst.msk [vmem:[#allocation2 + $0x20] sm:$0xff] %vm41, %v159
  %166 = vst.msk [vmem:[#allocation2 + $0x28] sm:$0xff] %vm41, %v160
  // Predicated region
  $region18: #{tpu_custom_call.1} parent=0 // pred_check
    %p167 = pneg %p14
  $region19: #{tpu_custom_call.1} parent=0 // pred_check_branch
    %169 = sbr.rel (%p167) target = $region21
  $region20: #{tpu_custom_call.1} parent=0 // pred_region
    %v170 = vld [vmem:[#allocation2] sm:$0xff]
    %v171 = vld [vmem:[#allocation2 + $0x8] sm:$0xff]
    %v172 = vld [vmem:[#allocation2 + $0x10] sm:$0xff]
    %v173 = vld [vmem:[#allocation2 + $0x18] sm:$0xff]
    %v174 = vld [vmem:[#allocation2 + $0x20] sm:$0xff]
    %v175 = vld [vmem:[#allocation2 + $0x28] sm:$0xff]
    %v176 = vld [vmem:[%s2] sm:$0x1]
    %v178 = vlaneseq
    %v179 = vshrl.u32 %v178, 7
    %v180 = vsub.s32 0, %v179
    %v181 = vrot.slane %v176, %v180
    %v183 = vadd.f32 %v170, %v181
    %v184 = vadd.f32 %v171, %v181
    %v185 = vadd.f32 %v172, %v181
    %v186 = vadd.f32 %v173, %v181
    %v187 = vadd.f32 %v174, %v181
    %v188 = vadd.f32 %v175, %v181
    %189 = vst.msk [vmem:[%s3] sm:$0xff] %vm41, %v183
    %190 = vst.msk [vmem:[%s3 + $0x8] sm:$0xff] %vm41, %v184
    %191 = vst.msk [vmem:[%s3 + $0x10] sm:$0xff] %vm41, %v185
    %192 = vst.msk [vmem:[%s3 + $0x18] sm:$0xff] %vm41, %v186
    %193 = vst.msk [vmem:[%s3 + $0x20] sm:$0xff] %vm41, %v187
    %194 = vst.msk [vmem:[%s3 + $0x28] sm:$0xff] %vm41, %v188
  $region21: #{tpu_custom_call.1} parent=0 // pred_fallthru
    _
  // Predicated region
  $region22: #{tpu_custom_call.1} parent=0 // pred_check
    _
  $region23: #{tpu_custom_call.1} parent=0 // pred_check_branch
    %196 = sbr.rel (0) target = $region25
  $region24: #{tpu_custom_call.1} parent=0 // pred_region
    _
  $region25: #{tpu_custom_call.1} parent=0 // pred_fallthru
    _
  // Predicated region
  $region26: #{tpu_custom_call.1} parent=0 // pred_check
    _
  $region27: #{tpu_custom_call.1} parent=0 // pred_check_branch
    %198 = sbr.rel (0) target = $region29
  $region28: #{tpu_custom_call.1} parent=0 // pred_region
    _
  $region29: #{tpu_custom_call.1} parent=0 // pred_fallthru
    _

</llo_original>
